<compile_context>
chip_gen: v6e
topology: v6e:2x2x1
jax: 0.10.0
libtpu: 0.0.40
codegen_flags: <defaults>
</compile_context>

<pallas_src>
import jax
import jax.numpy as jnp
from jax.experimental import pallas as pl
from jax.experimental.pallas import tpu as pltpu

_LANES = 128
_TARGET_TILE_BYTES = 2 * 1024 * 1024  # per-input tile target (~2 MiB)
_EPS = 1e-6


def _num_core_splits():
    """2 on v7x (two TensorCores per chip), else 1 (v5e/v6e single TC)."""
    try:
        kind = jax.devices()[0].device_kind.lower()
    except Exception:
        return 1
    if "v7" in kind or "7x" in kind:
        return 2
    return 1


def _make_mcc_kernel(tile_rows, steps_per_split, valid_rows, needs_mask):
    def kernel(yt_ref, yp_ref, o_ref):
        c = pl.program_id(0)
        j = pl.program_id(1)

        @pl.when(j == 0)
        def _():
            o_ref[...] = jnp.zeros_like(o_ref)

        yt = yt_ref[...].astype(jnp.float32)
        yp = yp_ref[...].astype(jnp.float32)

        if needs_mask:
            # Un-clamped logical tile index -> rows beyond `valid_rows`
            # (partial last tile, or a fully out-of-range clamped tile on the
            # 2-way split) contribute exactly zero.
            tile_idx = c * steps_per_split + j
            row_start = tile_idx * tile_rows
            row_ids = row_start + jax.lax.broadcasted_iota(
                jnp.int32, (tile_rows, 1), 0)
            valid = row_ids < valid_rows
            # Mask BEFORE the multiply so OOB garbage/NaN never propagates.
            yt = jnp.where(valid, yt, 0.0)
            yp = jnp.where(valid, yp, 0.0)

        # Per-lane partial sums (sublane reductions only; lanes kept).
        update = jnp.concatenate(
            [
                jnp.sum(yt * yp, axis=0, keepdims=True),
                jnp.sum(yt, axis=0, keepdims=True),
                jnp.sum(yp, axis=0, keepdims=True),
            ],
            axis=0,
        )  # (3, 128)
        o_ref[...] = o_ref[...] + update[None]

    return kernel


def mcc_loss(y_true, y_preds, *, max_tile_rows=None):
    """Soft MCC loss over all elements of y_true / y_preds (same shape)."""
    assert y_true.shape == y_preds.shape
    total = int(y_true.size)

    yt_flat = y_true.reshape(-1)
    yp_flat = y_preds.reshape(-1)

    rows = total // _LANES
    rem = total - rows * _LANES

    # Tail (<128 elements): tiny plain-JAX correction, no full-array pad/copy.
    if rem:
        tt = yt_flat[rows * _LANES:].astype(jnp.float32)
        tpp = yp_flat[rows * _LANES:].astype(jnp.float32)
        tail = jnp.stack([jnp.sum(tt * tpp), jnp.sum(tt), jnp.sum(tpp)])
    else:
        tail = jnp.zeros((3,), jnp.float32)

    if rows == 0:
        sums = tail
    else:
        main_t = yt_flat if rem == 0 else yt_flat[: rows * _LANES]
        main_p = yp_flat if rem == 0 else yp_flat[: rows * _LANES]
        yt2 = main_t.reshape(rows, _LANES)
        yp2 = main_p.reshape(rows, _LANES)

        # Dtype-aware tile rows: ~2 MiB per input tile (4096 f32 / 8192 bf16).
        itemsize = max(jnp.dtype(y_true.dtype).itemsize,
                       jnp.dtype(y_preds.dtype).itemsize)
        tile_budget = max(8, _TARGET_TILE_BYTES // (_LANES * itemsize))
        if max_tile_rows is not None:
            tile_budget = min(tile_budget, max(1, int(max_tile_rows)))
        if rows <= tile_budget:
            tile_rows = rows              # single block == full dim (always legal)
        else:
            tile_rows = max(8, (tile_budget // 8) * 8)

        total_tiles = pl.cdiv(rows, tile_rows)
        splits = min(_num_core_splits(), total_tiles)
        steps_per_split = pl.cdiv(total_tiles, splits)
        needs_mask = (rows % tile_rows != 0) or (splits * steps_per_split != total_tiles)

        def in_map(c, j):
            t = c * steps_per_split + j
            # Clamp so a fully out-of-range tile (odd tile count, 2-way split)
            # never issues an OOB DMA; its contribution is zeroed by the mask.
            t = jnp.minimum(t, total_tiles - 1)
            return (t, 0)

        if splits > 1:
            dim_sem = (getattr(pltpu, "CORE_PARALLEL", "parallel"),
                       getattr(pltpu, "ARBITRARY", "arbitrary"))
        else:
            dim_sem = ("arbitrary", "arbitrary")

        bytes_accessed = rows * _LANES * (
            jnp.dtype(y_true.dtype).itemsize + jnp.dtype(y_preds.dtype).itemsize
        ) + splits * 3 * _LANES * 4
        cost = pl.CostEstimate(flops=4 * rows * _LANES,
                               transcendentals=0,
                               bytes_accessed=int(bytes_accessed))

        partials = pl.pallas_call(
            _make_mcc_kernel(tile_rows, steps_per_split, rows, needs_mask),
            out_shape=jax.ShapeDtypeStruct((splits, 3, _LANES), jnp.float32),
            grid_spec=pltpu.PrefetchScalarGridSpec(
                num_scalar_prefetch=0,
                grid=(splits, steps_per_split),
                in_specs=[
                    pl.BlockSpec((tile_rows, _LANES), in_map),
                    pl.BlockSpec((tile_rows, _LANES), in_map),
                ],
                out_specs=pl.BlockSpec((1, 3, _LANES), lambda c, j: (c, 0, 0)),
            ),
            compiler_params=pltpu.CompilerParams(dimension_semantics=dim_sem),
            cost_estimate=cost,
        )(yt2, yp2)

        sums = jnp.sum(partials, axis=(0, 2)) + tail  # (3,)

    # Tiny scalar epilogue in plain JAX.
    tp, s_t, s_p = sums[0], sums[1], sums[2]
    n_elems = jnp.float32(total)
    fp = s_p - tp
    fn = s_t - tp
    tn = n_elems - s_t - s_p + tp
    numerator = tp * tn - fp * fn
    denominator = jnp.sqrt((tp + fp) * (tp + fn) * (tn + fp) * (tn + fn) + _EPS)
    return 1.0 - numerator / (denominator + _EPS)


def _mcc_loss_ref(y_true, y_preds):
    yt = y_true.astype(jnp.float32).reshape(-1)
    yp = y_preds.astype(jnp.float32).reshape(-1)
    tp = jnp.sum(yt * yp)
    tn = jnp.sum((1.0 - yt) * (1.0 - yp))
    fp = jnp.sum((1.0 - yt) * yp)
    fn = jnp.sum(yt * (1.0 - yp))
    num = tp * tn - fp * fn
    den = jnp.sqrt((tp + fp) * (tp + fn) * (tn + fp) * (tn + fn) + _EPS)
    return 1.0 - num / (den + _EPS)


if __name__ == "__main__":
    key = jax.random.PRNGKey(0)
    k1, k2, k3, k4, k5, k6 = jax.random.split(key, 6)

    # NCHW inputs, like the PyTorch training loop would provide.
    B, C, H, W = 2, 4, 16, 16
    y_true = (jax.random.uniform(k1, (B, C, H, W)) > 0.5).astype(jnp.float32)
    y_preds = jax.nn.sigmoid(jax.random.normal(k2, (B, C, H, W)))

    loss = jax.block_until_ready(mcc_loss(y_true, y_preds))
    ref = jax.block_until_ready(_mcc_loss_ref(y_true, y_preds))
    assert jnp.isfinite(loss), "kernel produced non-finite loss"
    assert jnp.allclose(loss, ref, rtol=1e-4, atol=1e-5), (loss, ref)

    # Ragged shape + bf16 inputs (exercises in-kernel up-cast + <128 tail).
    yt_b = (jax.random.uniform(k3, (2, 3, 15, 17)) > 0.5).astype(jnp.bfloat16)
    yp_b = jax.nn.sigmoid(jax.random.normal(k4, (2, 3, 15, 17))).astype(jnp.bfloat16)
    loss_b = jax.block_until_ready(mcc_loss(yt_b, yp_b))
    ref_b = jax.block_until_ready(_mcc_loss_ref(yt_b, yp_b))
    assert jnp.isfinite(loss_b), "kernel produced non-finite loss (bf16/ragged)"
    assert jnp.allclose(loss_b, ref_b, rtol=2e-2, atol=2e-3), (loss_b, ref_b)

    # Force tiny tiles to exercise the in-kernel ragged-row mask + clamp path.
    yt_c = (jax.random.uniform(k5, (2, 4, 20, 16)) > 0.5).astype(jnp.float32)
    yp_c = jax.nn.sigmoid(jax.random.normal(k6, (2, 4, 20, 16)))
    loss_c = jax.block_until_ready(mcc_loss(yt_c, yp_c, max_tile_rows=8))
    ref_c = jax.block_until_ready(_mcc_loss_ref(yt_c, yp_c))
    assert jnp.isfinite(loss_c), "kernel produced non-finite loss (masked tiles)"
    assert jnp.allclose(loss_c, ref_c, rtol=1e-4, atol=1e-5), (loss_c, ref_c)

    print("KERNEL_OK")
</pallas_src>

<mosaic_0001>
module attributes {stable_mosaic.version = 11 : i64} {
  func.func @kernel(%arg0: i32, %arg1: i32, %arg2: memref<16x128xf32, #tpu.memory_space<vmem>>, %arg3: memref<16x128xf32, #tpu.memory_space<vmem>>, %arg4: memref<1x3x128xf32, #tpu.memory_space<vmem>>) attributes {dimension_semantics = [#tpu.dimension_semantics<arbitrary>, #tpu.dimension_semantics<arbitrary>], iteration_bounds = array<i64: 1, 1>, scalar_prefetch = 0 : i64, scratch_operands = 0 : i64, tpu.core_type = #tpu.core_type<tc>, window_params = [{transform_indices = @transform_0, window_bounds = array<i64: 16, 128>}, {transform_indices = @transform_1, window_bounds = array<i64: 16, 128>}, {transform_indices = @transform_2, window_bounds = array<i64: 1, 3, 128>}]} {
    %c0_i32 = arith.constant 0 : i32
    %0 = arith.cmpi eq, %arg1, %c0_i32 : i32
    %1 = arith.extui %0 : i1 to i32
    %c0_i32_0 = arith.constant 0 : i32
    %2 = arith.cmpi ne, %1, %c0_i32_0 : i32
    scf.if %2 {
      %cst_12 = arith.constant 0.000000e+00 : f32
      %17 = vector.broadcast %cst_12 : f32 to vector<1x3x128xf32>
      %c0_13 = arith.constant 0 : index
      %c0_14 = arith.constant 0 : index
      %c0_15 = arith.constant 0 : index
      %18 = vector.load %arg4[%c0_13, %c0_14, %c0_15] : memref<1x3x128xf32, #tpu.memory_space<vmem>>, vector<1x3x128xf32>
      tpu.vector_store %arg4[%c0_13, %c0_14, %c0_15], %17 {strides = array<i32>} : memref<1x3x128xf32, #tpu.memory_space<vmem>>, vector<1x3x128xf32>,
    } else {
    }
    %c0 = arith.constant 0 : index
    %c0_1 = arith.constant 0 : index
    %3 = vector.load %arg2[%c0, %c0_1] : memref<16x128xf32, #tpu.memory_space<vmem>>, vector<16x128xf32>
    %c0_2 = arith.constant 0 : index
    %c0_3 = arith.constant 0 : index
    %4 = vector.load %arg3[%c0_2, %c0_3] : memref<16x128xf32, #tpu.memory_space<vmem>>, vector<16x128xf32>
    %5 = arith.mulf %3, %4 : vector<16x128xf32>
    %cst = arith.constant dense<0.000000e+00> : vector<128xf32>
    %6 = vector.multi_reduction <add>, %5, %cst [0] : vector<16x128xf32> to vector<128xf32>
    %7 = vector.shape_cast %6 : vector<128xf32> to vector<1x128xf32>
    %cst_4 = arith.constant dense<0.000000e+00> : vector<128xf32>
    %8 = vector.multi_reduction <add>, %3, %cst_4 [0] : vector<16x128xf32> to vector<128xf32>
    %9 = vector.shape_cast %8 : vector<128xf32> to vector<1x128xf32>
    %cst_5 = arith.constant dense<0.000000e+00> : vector<128xf32>
    %10 = vector.multi_reduction <add>, %4, %cst_5 [0] : vector<16x128xf32> to vector<128xf32>
    %11 = vector.shape_cast %10 : vector<128xf32> to vector<1x128xf32>
    %12 = tpu.concatenate %7, %9, %11 in 0 : vector<1x128xf32>, vector<1x128xf32>, vector<1x128xf32> -> vector<3x128xf32>
    %c0_6 = arith.constant 0 : index
    %c0_7 = arith.constant 0 : index
    %c0_8 = arith.constant 0 : index
    %13 = vector.load %arg4[%c0_6, %c0_7, %c0_8] : memref<1x3x128xf32, #tpu.memory_space<vmem>>, vector<1x3x128xf32>
    %14 = vector.shape_cast %12 : vector<3x128xf32> to vector<1x3x128xf32>
    %15 = arith.addf %13, %14 : vector<1x3x128xf32>
    %c0_9 = arith.constant 0 : index
    %c0_10 = arith.constant 0 : index
    %c0_11 = arith.constant 0 : index
    %16 = vector.load %arg4[%c0_9, %c0_10, %c0_11] : memref<1x3x128xf32, #tpu.memory_space<vmem>>, vector<1x3x128xf32>
    tpu.vector_store %arg4[%c0_9, %c0_10, %c0_11], %15 {strides = array<i32>} : memref<1x3x128xf32, #tpu.memory_space<vmem>>, vector<1x3x128xf32>,
    return
  }
  func.func @transform_0(%arg0: i32, %arg1: i32) -> (i32, i32) {
    %c1_i32 = arith.constant 1 : i32
    %0 = arith.muli %arg0, %c1_i32 : i32
    %1 = arith.addi %0, %arg1 : i32
    %c0_i32 = arith.constant 0 : i32
    %2 = arith.minsi %1, %c0_i32 : i32
    %c0_i32_0 = arith.constant 0 : i32
    %c0_i32_1 = arith.constant 0 : i32
    return %2, %c0_i32_0 : i32, i32
  }
  func.func @transform_1(%arg0: i32, %arg1: i32) -> (i32, i32) {
    %c1_i32 = arith.constant 1 : i32
    %0 = arith.muli %arg0, %c1_i32 : i32
    %1 = arith.addi %0, %arg1 : i32
    %c0_i32 = arith.constant 0 : i32
    %2 = arith.minsi %1, %c0_i32 : i32
    %c0_i32_0 = arith.constant 0 : i32
    %c0_i32_1 = arith.constant 0 : i32
    return %2, %c0_i32_0 : i32, i32
  }
  func.func @transform_2(%arg0: i32, %arg1: i32) -> (i32, i32, i32) {
    %c0_i32 = arith.constant 0 : i32
    %c0_i32_0 = arith.constant 0 : i32
    %c0_i32_1 = arith.constant 0 : i32
    return %arg0, %c0_i32, %c0_i32_0 : i32, i32, i32
  }
}

</mosaic_0001>

<llo_original>
// kernel: tpu_custom_call.1
$region0: #{tpu_custom_call.1}
  #allocation0 [shape = 'u32[]', space=smem, size = 0x4, offset = 0x4, fixed_abs, tag = 'smem constant byte address 0x4 - core index']
  #allocation1 [shape = 'u32[144,128]{1,0:T(1,128)}', space=vmem, size = 0x12000, scoped, tag = 'internal scratch']
  %s0 = inlined_call_operand.hbm [shape: f32[16,128], index: 0, kind: input, shape index: {}]
  %s1 = inlined_call_operand.hbm [shape: f32[16,128], index: 1, kind: input, shape index: {}]
  %s2 = inlined_call_operand.vmem [shape: f32[1,3,128], index: 2, kind: output, shape index: {}]
  %s3 = sld [smem:[#allocation0]]
  $region30: #{tpu_custom_call.1} parent=0
    _
  %s5 = ssub.s32 1, %s3
  %s6 = scalar_select 0, %s5, %s3
  $region1: #{tpu_custom_call.1} parent=0
    #allocation2 [shape = 'u8[8192]{0}', space=vmem, size = 0x2000, scoped, tag = 'input window, operand 0, single buffered']
    #allocation3 [shape = 's32[1]{0}', space=sflag, size = 0x4, scoped, tag = 'scoped memory for tpu_custom_call.1']
    #allocation4 [shape = 'u8[8192]{0}', space=vmem, size = 0x2000, scoped, tag = 'input window, operand 1, single buffered']
    #allocation5 [shape = 's32[1]{0}', space=sflag, size = 0x4, scoped, tag = 'scoped memory for tpu_custom_call.1']
    %7 = vsyncpa [#allocation3], 0
    %8 = vsyncpa [#allocation5], 0
    // Predicated region
    $region2: #{tpu_custom_call.1} parent=1 // pred_check
      _
    $region3: #{tpu_custom_call.1} parent=1 // pred_check_branch
      %10 = sbr.rel (0) target = $region5
    $region4: #{tpu_custom_call.1} parent=1 // pred_region
      %s11 = sadd.s32 0, 0
      %p12 = scmp.lt.s32.totalorder %s11, 0
      %s13 = scalar_select %p12, %s11, 0
      %s14 = smul.u32 2, %s13
      %s16 = ssub.s32 256, 256
      %17 = vsyncadd [#allocation3], %s16
      %s18 = smul.addr %s14, 128
      %s19 = scalar_lea.hbm %s0, %s18
      %s20 = sshll.u32 [#allocation2], 4
      %s21 = int_to_ptr.vmem [resolvable:$true] %s20
      %26 = dma.hbm_to_vmem [thread:$0]  %s19, 256, %s21, [#allocation3], 128, 128, 8
    $region5: #{tpu_custom_call.1} parent=1 // pred_fallthru
      _
    // Predicated region
    $region6: #{tpu_custom_call.1} parent=1 // pred_check
      _
    $region7: #{tpu_custom_call.1} parent=1 // pred_check_branch
      %28 = sbr.rel (0) target = $region9
    $region8: #{tpu_custom_call.1} parent=1 // pred_region
      %s29 = sadd.s32 0, 0
      %p30 = scmp.lt.s32.totalorder %s29, 0
      %s31 = scalar_select %p30, %s29, 0
      %s32 = smul.u32 2, %s31
      %s34 = ssub.s32 256, 256
      %35 = vsyncadd [#allocation5], %s34
      %s36 = smul.addr %s32, 128
      %s37 = scalar_lea.hbm %s1, %s36
      %s38 = sshll.u32 [#allocation4], 4
      %s39 = int_to_ptr.vmem [resolvable:$true] %s38
      %44 = dma.hbm_to_vmem [thread:$0]  %s37, 256, %s39, [#allocation5], 128, 128, 8
    $region9: #{tpu_custom_call.1} parent=1 // pred_fallthru
      _
    // Predicated region
    $region10: #{tpu_custom_call.1} parent=1 // pred_check
      _
    $region11: #{tpu_custom_call.1} parent=1 // pred_check_branch
      %46 = sbr.rel (0) target = $region13
    $region12: #{tpu_custom_call.1} parent=1 // pred_region
      %47 = dma.done [#allocation3], 256
    $region13: #{tpu_custom_call.1} parent=1 // pred_fallthru
      _
    // Predicated region
    $region14: #{tpu_custom_call.1} parent=1 // pred_check
      _
    $region15: #{tpu_custom_call.1} parent=1 // pred_check_branch
      %49 = sbr.rel (0) target = $region17
    $region16: #{tpu_custom_call.1} parent=1 // pred_region
      %50 = dma.done [#allocation5], 256
    $region17: #{tpu_custom_call.1} parent=1 // pred_fallthru
      _
    %s51 = sadd.s32 0, 0
    %p52 = scmp.lt.s32.totalorder %s51, 0
    %s53 = scalar_select %p52, %s51, 0
    %s54 = smul.u32 2, %s53
    %s55 = sadd.s32 0, 0
    %p56 = scmp.lt.s32.totalorder %s55, 0
    %s57 = scalar_select %p56, %s55, 0
    %s58 = smul.u32 2, %s57
    %p59 = scmp.eq.s32.totalorder 0, 0
    // Predicated region
    $region18: #{tpu_custom_call.1} parent=1 // pred_check
      %p60 = pneg %p59
    $region19: #{tpu_custom_call.1} parent=1 // pred_check_branch
      %62 = sbr.rel (%p60) target = $region21
    $region20: #{tpu_custom_call.1} parent=1 // pred_region
      %63 = vst [vmem:[%s2] sm:$0x7] 0.0
    $region21: #{tpu_custom_call.1} parent=1 // pred_fallthru
      _
    %v64 = vld [vmem:[#allocation2] sm:$0xff]
    %v65 = vld [vmem:[#allocation2 + $0x8] sm:$0xff]
    %v66 = vld [vmem:[#allocation4] sm:$0xff]
    %v67 = vld [vmem:[#allocation4 + $0x8] sm:$0xff]
    %v68 = vmul.f32 %v64, %v66
    %v69 = vmul.f32 %v65, %v67
    %v70 = vadd.f32 %v68, %v69
    %v71 = vrot.slane %v70, 4
    %v72 = vadd.f32 %v70, %v71
    %v73 = vrot.slane %v72, 2
    %v74 = vadd.f32 %v72, %v73
    %v75 = vrot.slane %v74, 1
    %v76 = vadd.f32 %v74, %v75
    %v77 = vadd.f32 %v64, %v65
    %v78 = vrot.slane %v77, 4
    %v79 = vadd.f32 %v77, %v78
    %v80 = vrot.slane %v79, 2
    %v81 = vadd.f32 %v79, %v80
    %v82 = vrot.slane %v81, 1
    %v83 = vadd.f32 %v81, %v82
    %v84 = vadd.f32 %v66, %v67
    %v85 = vrot.slane %v84, 4
    %v86 = vadd.f32 %v84, %v85
    %v87 = vrot.slane %v86, 2
    %v88 = vadd.f32 %v86, %v87
    %v89 = vrot.slane %v88, 1
    %v90 = vadd.f32 %v88, %v89
    %vm91 = vcmask 1040384
    %v92 = vsel %vm91, %v76, %v83
    %vm93 = vcmask 1041408
    %v94 = vsel %vm93, %v92, %v90
    %v95 = vld [vmem:[%s2] sm:$0x7]
    %v96 = vadd.f32 %v95, %v94
    %97 = vst [vmem:[%s2] sm:$0x7] %v96
    // Predicated region
    $region22: #{tpu_custom_call.1} parent=1 // pred_check
      _
    $region23: #{tpu_custom_call.1} parent=1 // pred_check_branch
      %99 = sbr.rel (0) target = $region25
    $region24: #{tpu_custom_call.1} parent=1 // pred_region
      _
    $region25: #{tpu_custom_call.1} parent=1 // pred_fallthru
      _
    // Predicated region
    $region26: #{tpu_custom_call.1} parent=1 // pred_check
      _
    $region27: #{tpu_custom_call.1} parent=1 // pred_check_branch
      %101 = sbr.rel (0) target = $region29
    $region28: #{tpu_custom_call.1} parent=1 // pred_region
      _
    $region29: #{tpu_custom_call.1} parent=1 // pred_fallthru
      _
    %102 = vsyncpa [#allocation3], 1
    %103 = vsyncpa [#allocation5], 1

</llo_original>
